<compile_context>
chip_gen: v5e
topology: v5e:2x2
jax: 0.10.0
libtpu: 0.0.40
codegen_flags: <defaults>
</compile_context>

<pallas_src>
import functools

import numpy as np
import jax
import jax.numpy as jnp
from jax.experimental import pallas as pl
from jax.experimental.pallas import tpu as pltpu


def make_kernel(k, upsample_factor=1):
    """Replicates the PyTorch make_kernel(): outer product of 1-D taps, normalized."""
    k = np.asarray(k, dtype=np.float32)
    if k.ndim == 1:
        k = np.outer(k, k)
    k = k / k.sum()
    if upsample_factor > 1:
        k = k * (upsample_factor ** 2)
    return k


def _separable_factors(kernel, upsample_factor=1):
    """Returns [(kv_r, kw_r), ...] with sum_r outer(kv_r, kw_r) == make_kernel(kernel)."""
    k = np.asarray(kernel, dtype=np.float64)
    if k.ndim == 1:
        a = k / k.sum()
        if upsample_factor > 1:
            a = a * float(upsample_factor)
        return [(a, a)]
    k2d = k / k.sum()
    if upsample_factor > 1:
        k2d = k2d * float(upsample_factor) ** 2
    u, s, vt = np.linalg.svd(k2d)
    comps = []
    for r in range(len(s)):
        if s[r] > 1e-7 * max(s[0], 1e-30):
            comps.append((u[:, r] * s[r], vt[r, :]))
    return comps


def _band_matrix(taps_flipped, in_size, out_size, pad0):
    """B[p, q] = taps_flipped[p + pad0 - q] inside the band, else 0.

    x_banded = x @ B implements the padded/cropped horizontal FIR exactly
    (the zero-pad / crop is just band placement)."""
    taps = np.asarray(taps_flipped, dtype=np.float32)
    kt = taps.shape[0]
    p = np.arange(in_size)[:, None]
    q = np.arange(out_size)[None, :]
    j = p + int(pad0) - q
    valid = (j >= 0) & (j < kt)
    return np.where(valid, taps[np.clip(j, 0, kt - 1)], 0.0).astype(np.float32)


def _vertical_plan(kv_flipped, in_h, out_h, pad_y0):
    """Per-tap (tap, q0, q1, s0): acc[:, q0:q1] += tap * y[:, s0:s0+(q1-q0)].

    The static row ranges implement the vertical zero-pad / crop."""
    plan = []
    for i, tap in enumerate(np.asarray(kv_flipped, dtype=np.float64)):
        if tap == 0.0:
            continue
        q0 = max(0, pad_y0 - i)
        q1 = min(out_h, in_h + pad_y0 - i)
        if q1 <= q0:
            continue
        s0 = q0 + i - pad_y0
        plan.append((float(tap), int(q0), int(q1), int(s0)))
    return tuple(plan)


def _vmem_capacity_bytes():
    try:
        info = pltpu.get_tpu_info()
        cap = getattr(info, "vmem_capacity_bytes", None)
        if cap:
            return int(cap)
    except Exception:
        pass
    return 64 * 1024 * 1024  # conservative fallback (v7x-sized)


def _blur_kernel(x_ref, bw_ref, o_ref, acc_ref, *, v_plans):
    # x_ref:  (tb, H, W)        input tile (N*C tile of NCHW images)
    # bw_ref: (R, W, out_w) f32 static banded matrices (horizontal taps + W pad)
    # o_ref:  (tb, out_h, out_w)
    # acc_ref: VMEM scratch (tb, out_h, out_w) f32
    tb, h, w = x_ref.shape
    out_w = bw_ref.shape[-1]

    # No upfront f32 copy of the input: the MXU dot upconverts on the fly.
    x2 = x_ref[...].reshape(tb * h, w)

    acc_ref[...] = jnp.zeros_like(acc_ref)
    for r, plan in enumerate(v_plans):
        # Horizontal (W) pass on the MXU: (tb*H, W) @ (W, out_w).
        y = jnp.dot(x2, bw_ref[r], preferred_element_type=jnp.float32)
        y = y.reshape(tb, h, out_w)
        # Vertical (H) pass: sublane-shifted slice accumulation on the VPU.
        for tap, q0, q1, s0 in plan:
            acc_ref[:, q0:q1, :] += tap * y[:, s0:s0 + (q1 - q0), :]

    o_ref[...] = acc_ref[...].astype(o_ref.dtype)


def blur_forward(x, kernel, pad, upsample_factor=1):
    """Blur.forward: upfirdn2d(x, make_kernel(kernel)*u^2, up=1, down=1, pad=pad).

    x: (N, C, H, W); kernel: 1-D taps (typical Blur usage) or 2-D kernel;
    pad: (pad0, pad1).  Returns (N, C, H+pad0+pad1-kh+1, W+pad0+pad1-kw+1).
    """
    n, c, h, w = x.shape
    pad_y0 = pad_x0 = int(pad[0])
    pad_y1 = pad_x1 = int(pad[1])

    comps = _separable_factors(kernel, upsample_factor)
    kh = len(comps[0][0])
    kw = len(comps[0][1])
    out_h = h + pad_y0 + pad_y1 - kh + 1
    out_w = w + pad_x0 + pad_x1 - kw + 1
    assert out_h > 0 and out_w > 0, "blur output would be empty"

    bw_stack = np.stack(
        [_band_matrix(kw_r[::-1], w, out_w, pad_x0) for _, kw_r in comps])
    v_plans = tuple(
        _vertical_plan(kv_r[::-1], h, out_h, pad_y0) for kv_r, _ in comps)
    bw_stack = jnp.asarray(bw_stack, dtype=jnp.float32)
    n_rank = int(bw_stack.shape[0])

    nc = n * c
    x_flat = x.reshape(nc, h, w)           # free reshape, stays NCHW in HBM

    # --- generation-aware tile sizing (count the f32 intermediates too) ---
    isz = jnp.dtype(x.dtype).itemsize
    vmem_cap = _vmem_capacity_bytes()       # 128 MiB v5e/v6e, 64 MiB v7x
    block_budget = max(4 << 20, vmem_cap // 4)
    per_nc = (2 * h * w * isz               # double-buffered input block
              + 2 * out_h * out_w * isz     # double-buffered output block
              + out_h * out_w * 4           # f32 accumulator scratch
              + h * out_w * 4               # f32 horizontal-pass intermediate
              + h * w * 4)                  # possible f32 upcast inside the dot
    fixed = 2 * int(bw_stack.size) * 4      # resident band matrices
    tb_budget = max(1, (block_budget - fixed) // per_nc)
    min_steps = min(nc, 4)                  # >=4 grid steps: megacore + DMA overlap
    tb = int(max(1, min(tb_budget, -(-nc // min_steps), nc)))
    grid = (pl.cdiv(nc, tb),)

    vmem_limit = int(min(vmem_cap * 3 // 4, 100 << 20))

    flops = 0
    for plan in v_plans:
        flops += 2 * nc * (h * w * out_w + len(plan) * out_h * out_w)
    cost = pl.CostEstimate(
        flops=int(flops),
        transcendentals=0,
        bytes_accessed=int(nc * (h * w + out_h * out_w) * isz
                           + int(bw_stack.size) * 4))

    out_flat = pl.pallas_call(
        functools.partial(_blur_kernel, v_plans=v_plans),
        out_shape=jax.ShapeDtypeStruct((nc, out_h, out_w), x.dtype),
        grid_spec=pltpu.PrefetchScalarGridSpec(
            num_scalar_prefetch=0,
            grid=grid,
            in_specs=[
                pl.BlockSpec((tb, h, w), lambda i: (i, 0, 0)),
                pl.BlockSpec((n_rank, w, out_w), lambda i: (0, 0, 0)),
            ],
            out_specs=pl.BlockSpec((tb, out_h, out_w), lambda i: (i, 0, 0)),
            scratch_shapes=[pltpu.VMEM((tb, out_h, out_w), jnp.float32)],
        ),
        compiler_params=pltpu.CompilerParams(
            dimension_semantics=("parallel",),
            vmem_limit_bytes=vmem_limit),
        cost_estimate=cost,
    )(x_flat, bw_stack)

    return out_flat.reshape(n, c, out_h, out_w)


if __name__ == "__main__":
    # Small shapes consistent with Blur usage: batch=2, channels=4, 16x16,
    # StyleGAN blur taps [1,3,3,1] with pad=(2,1) (shape-preserving here).
    batch, channel, size = 2, 4, 16
    blur_taps_1d = [1, 3, 3, 1]
    pad = (2, 1)

    key = jax.random.PRNGKey(0)
    x = jax.random.normal(key, (batch, channel, size, size), dtype=jnp.float32)

    out = blur_forward(x, blur_taps_1d, pad)
    out = jax.block_until_ready(out)

    # Pure-JAX reference: depthwise conv == cross-correlation with the flipped
    # kernel on the zero-padded input, exactly like upfirdn2d_native.
    k2d = jnp.asarray(make_kernel(blur_taps_1d))
    x2 = x.reshape(batch * channel, 1, size, size)
    wflip = jnp.flip(k2d, (0, 1)).reshape(1, 1, k2d.shape[0], k2d.shape[1])
    ref = jax.lax.conv_general_dilated(
        x2, wflip, window_strides=(1, 1),
        padding=((pad[0], pad[1]), (pad[0], pad[1])),
        dimension_numbers=("NCHW", "OIHW", "NCHW"))
    ref = ref.reshape(batch, channel, ref.shape[2], ref.shape[3])

    assert out.shape == ref.shape, (out.shape, ref.shape)
    assert out.dtype == x.dtype, out.dtype
    err = float(jnp.max(jnp.abs(out - ref)))
    assert jnp.allclose(out, ref, atol=1e-5, rtol=1e-5), f"max abs err {err}"

    print("KERNEL_OK")
</pallas_src>

<mosaic_0001>
module attributes {stable_mosaic.version = 11 : i64} {
  func.func @_blur_kernel(%arg0: i32, %arg1: memref<2x16x16xf32, #tpu.memory_space<vmem>>, %arg2: memref<1x16x16xf32, #tpu.memory_space<vmem>>, %arg3: memref<2x16x16xf32, #tpu.memory_space<vmem>>, %arg4: memref<2x16x16xf32, #tpu.memory_space<vmem>>) attributes {dimension_semantics = [#tpu.dimension_semantics<parallel>], iteration_bounds = array<i64: 4>, scalar_prefetch = 0 : i64, scratch_operands = 1 : i64, tpu.core_type = #tpu.core_type<tc>, window_params = [{transform_indices = @transform_0, window_bounds = array<i64: 2, 16, 16>}, {pipeline_mode = #tpu.pipeline_mode<synchronous>, transform_indices = @transform_1, window_bounds = array<i64: 1, 16, 16>}, {transform_indices = @transform_2, window_bounds = array<i64: 2, 16, 16>}]} {
    %c0 = arith.constant 0 : index
    %c0_0 = arith.constant 0 : index
    %c0_1 = arith.constant 0 : index
    %0 = vector.load %arg1[%c0, %c0_0, %c0_1] : memref<2x16x16xf32, #tpu.memory_space<vmem>>, vector<2x16x16xf32>
    %1 = vector.shape_cast %0 : vector<2x16x16xf32> to vector<32x16xf32>
    %cst = arith.constant 0.000000e+00 : f32
    %2 = vector.broadcast %cst : f32 to vector<2x16x16xf32>
    %c0_2 = arith.constant 0 : index
    %c0_3 = arith.constant 0 : index
    %c0_4 = arith.constant 0 : index
    %3 = vector.load %arg4[%c0_2, %c0_3, %c0_4] : memref<2x16x16xf32, #tpu.memory_space<vmem>>, vector<2x16x16xf32>
    tpu.vector_store %arg4[%c0_2, %c0_3, %c0_4], %2 {strides = array<i32>} : memref<2x16x16xf32, #tpu.memory_space<vmem>>, vector<2x16x16xf32>,
    %c0_5 = arith.constant 0 : index
    %c0_6 = arith.constant 0 : index
    %c0_7 = arith.constant 0 : index
    %4 = vector.load %arg2[%c0_5, %c0_6, %c0_7] : memref<1x16x16xf32, #tpu.memory_space<vmem>>, vector<1x16x16xf32>
    %5 = vector.shape_cast %4 : vector<1x16x16xf32> to vector<16x16xf32>
    %cst_8 = arith.constant dense<0.000000e+00> : vector<32x16xf32>
    %6 = tpu.matmul %1, %5, %cst_8 {dimension_numbers = #tpu.dot_dimension_numbers<[1], [0], [0], [1], [0, 0, 1, 1], [], []>} : vector<32x16xf32>, vector<16x16xf32>, vector<32x16xf32> -> vector<32x16xf32>
    %7 = vector.shape_cast %6 : vector<32x16xf32> to vector<2x16x16xf32>
    %c0_9 = arith.constant 0 : index
    %c2 = arith.constant 2 : index
    %c0_10 = arith.constant 0 : index
    %8 = vector.load %arg4[%c0_9, %c2, %c0_10] : memref<2x16x16xf32, #tpu.memory_space<vmem>>, vector<2x14x16xf32>
    %9 = vector.extract_strided_slice %7 {offsets = [0, 0, 0], sizes = [2, 14, 16], strides = [1, 1, 1]} : vector<2x16x16xf32> to vector<2x14x16xf32>
    %cst_11 = arith.constant 1.250000e-01 : f32
    %10 = vector.broadcast %cst_11 : f32 to vector<2x14x16xf32>
    %11 = arith.mulf %10, %9 : vector<2x14x16xf32>
    %12 = arith.addf %8, %11 : vector<2x14x16xf32>
    %c0_12 = arith.constant 0 : index
    %c2_13 = arith.constant 2 : index
    %c0_14 = arith.constant 0 : index
    %13 = vector.load %arg4[%c0_12, %c2_13, %c0_14] : memref<2x16x16xf32, #tpu.memory_space<vmem>>, vector<2x14x16xf32>
    tpu.vector_store %arg4[%c0_12, %c2_13, %c0_14], %12 {strides = array<i32>} : memref<2x16x16xf32, #tpu.memory_space<vmem>>, vector<2x14x16xf32>,
    %c0_15 = arith.constant 0 : index
    %c1 = arith.constant 1 : index
    %c0_16 = arith.constant 0 : index
    %14 = vector.load %arg4[%c0_15, %c1, %c0_16] : memref<2x16x16xf32, #tpu.memory_space<vmem>>, vector<2x15x16xf32>
    %15 = vector.extract_strided_slice %7 {offsets = [0, 0, 0], sizes = [2, 15, 16], strides = [1, 1, 1]} : vector<2x16x16xf32> to vector<2x15x16xf32>
    %cst_17 = arith.constant 3.750000e-01 : f32
    %16 = vector.broadcast %cst_17 : f32 to vector<2x15x16xf32>
    %17 = arith.mulf %16, %15 : vector<2x15x16xf32>
    %18 = arith.addf %14, %17 : vector<2x15x16xf32>
    %c0_18 = arith.constant 0 : index
    %c1_19 = arith.constant 1 : index
    %c0_20 = arith.constant 0 : index
    %19 = vector.load %arg4[%c0_18, %c1_19, %c0_20] : memref<2x16x16xf32, #tpu.memory_space<vmem>>, vector<2x15x16xf32>
    tpu.vector_store %arg4[%c0_18, %c1_19, %c0_20], %18 {strides = array<i32>} : memref<2x16x16xf32, #tpu.memory_space<vmem>>, vector<2x15x16xf32>,
    %c0_21 = arith.constant 0 : index
    %c0_22 = arith.constant 0 : index
    %c0_23 = arith.constant 0 : index
    %20 = vector.load %arg4[%c0_21, %c0_22, %c0_23] : memref<2x16x16xf32, #tpu.memory_space<vmem>>, vector<2x16x16xf32>
    %cst_24 = arith.constant 3.750000e-01 : f32
    %21 = vector.broadcast %cst_24 : f32 to vector<2x16x16xf32>
    %22 = arith.mulf %21, %7 : vector<2x16x16xf32>
    %23 = arith.addf %20, %22 : vector<2x16x16xf32>
    %c0_25 = arith.constant 0 : index
    %c0_26 = arith.constant 0 : index
    %c0_27 = arith.constant 0 : index
    %24 = vector.load %arg4[%c0_25, %c0_26, %c0_27] : memref<2x16x16xf32, #tpu.memory_space<vmem>>, vector<2x16x16xf32>
    tpu.vector_store %arg4[%c0_25, %c0_26, %c0_27], %23 {strides = array<i32>} : memref<2x16x16xf32, #tpu.memory_space<vmem>>, vector<2x16x16xf32>,
    %c0_28 = arith.constant 0 : index
    %c0_29 = arith.constant 0 : index
    %c0_30 = arith.constant 0 : index
    %25 = vector.load %arg4[%c0_28, %c0_29, %c0_30] : memref<2x16x16xf32, #tpu.memory_space<vmem>>, vector<2x15x16xf32>
    %26 = vector.extract_strided_slice %7 {offsets = [0, 1, 0], sizes = [2, 15, 16], strides = [1, 1, 1]} : vector<2x16x16xf32> to vector<2x15x16xf32>
    %cst_31 = arith.constant 1.250000e-01 : f32
    %27 = vector.broadcast %cst_31 : f32 to vector<2x15x16xf32>
    %28 = arith.mulf %27, %26 : vector<2x15x16xf32>
    %29 = arith.addf %25, %28 : vector<2x15x16xf32>
    %c0_32 = arith.constant 0 : index
    %c0_33 = arith.constant 0 : index
    %c0_34 = arith.constant 0 : index
    %30 = vector.load %arg4[%c0_32, %c0_33, %c0_34] : memref<2x16x16xf32, #tpu.memory_space<vmem>>, vector<2x15x16xf32>
    tpu.vector_store %arg4[%c0_32, %c0_33, %c0_34], %29 {strides = array<i32>} : memref<2x16x16xf32, #tpu.memory_space<vmem>>, vector<2x15x16xf32>,
    %c0_35 = arith.constant 0 : index
    %c0_36 = arith.constant 0 : index
    %c0_37 = arith.constant 0 : index
    %31 = vector.load %arg4[%c0_35, %c0_36, %c0_37] : memref<2x16x16xf32, #tpu.memory_space<vmem>>, vector<2x16x16xf32>
    %c0_38 = arith.constant 0 : index
    %c0_39 = arith.constant 0 : index
    %c0_40 = arith.constant 0 : index
    %32 = vector.load %arg3[%c0_38, %c0_39, %c0_40] : memref<2x16x16xf32, #tpu.memory_space<vmem>>, vector<2x16x16xf32>
    tpu.vector_store %arg3[%c0_38, %c0_39, %c0_40], %31 {strides = array<i32>} : memref<2x16x16xf32, #tpu.memory_space<vmem>>, vector<2x16x16xf32>,
    return
  }
  func.func @transform_0(%arg0: i32) -> (i32, i32, i32) {
    %c0_i32 = arith.constant 0 : i32
    %c0_i32_0 = arith.constant 0 : i32
    %c0_i32_1 = arith.constant 0 : i32
    return %arg0, %c0_i32, %c0_i32_0 : i32, i32, i32
  }
  func.func @transform_1(%arg0: i32) -> (i32, i32, i32) {
    %c0_i32 = arith.constant 0 : i32
    %c0_i32_0 = arith.constant 0 : i32
    %c0_i32_1 = arith.constant 0 : i32
    %c0_i32_2 = arith.constant 0 : i32
    return %c0_i32, %c0_i32_0, %c0_i32_1 : i32, i32, i32
  }
  func.func @transform_2(%arg0: i32) -> (i32, i32, i32) {
    %c0_i32 = arith.constant 0 : i32
    %c0_i32_0 = arith.constant 0 : i32
    %c0_i32_1 = arith.constant 0 : i32
    return %arg0, %c0_i32, %c0_i32_0 : i32, i32, i32
  }
}

</mosaic_0001>

<llo_original>
// kernel: tpu_custom_call.1
$region0: #{tpu_custom_call.1}
  #allocation0 [shape = 'u32[]', space=smem, size = 0x4, offset = 0x4, fixed_abs, tag = 'smem constant byte address 0x4 - core index']
  #allocation1 [shape = 'u32[72,128]{1,0:T(1,128)}', space=vmem, size = 0x9000, scoped, tag = 'internal scratch']
  #allocation2 [shape = 'f32[2,16,16]{2,1,0:T(8,128)}', space=vmem, size = 0x4000, scoped, tag = 'scratch operand']
  %s0 = inlined_call_operand.hbm [shape: f32[8,16,16], index: 0, kind: input, shape index: {}]
  %s1 = inlined_call_operand.hbm [shape: f32[1,16,16], index: 1, kind: input, shape index: {}]
  %s2 = inlined_call_operand.hbm [shape: f32[8,16,16], index: 2, kind: output, shape index: {}]
  %s3 = sld [smem:[#allocation0]]
  $region49: #{tpu_custom_call.1} parent=0
    _
  %s5 = ssub.s32 1, %s3
  %s6 = scalar_select 0, %s5, %s3
  $region1: #{tpu_custom_call.1} parent=0
    #allocation3 [shape = 'u8[32768]{0}', space=vmem, size = 0x8000, scoped, tag = 'input window, operand 0']
    #allocation4 [shape = 's32[2]{0}', space=sflag, size = 0x8, scoped, tag = 'scoped memory for tpu_custom_call.1']
    #allocation5 [shape = 's32[2]{0}', space=sflag, size = 0x8, scoped, tag = 'scoped memory for tpu_custom_call.1']
    #allocation6 [shape = 'u8[8192]{0}', space=vmem, size = 0x2000, scoped, tag = 'input window, operand 1, single buffered']
    #allocation7 [shape = 's32[1]{0}', space=sflag, size = 0x4, scoped, tag = 'scoped memory for tpu_custom_call.1']
    #allocation8 [shape = 'u8[32768]{0}', space=vmem, size = 0x8000, scoped, tag = 'output window, operand 0']
    %7 = vsyncpa [#allocation4], 0
    %s8 = scalar_lea.sflag [#allocation4], 1
    %9 = vsyncpa %s8, 0
    %10 = vsyncpa [#allocation7], 0
    %11 = vsyncpa [#allocation5], 0
    %s12 = scalar_lea.sflag [#allocation5], 1
    %13 = vsyncpa %s12, 0
    loop: start=0, step=1, limit=6
    $region2: #{tpu_custom_call.1} parent=1 // loop_pre_header
      _
    $region3: #{tpu_custom_call.1} parent=1 // loop_header
      %s15 = sphi 0, %s19
      %p16 = scmp.ge.s32.totalorder %s15, 6
      %s25 = sphi 0, %s27
      %s28 = sphi 0, %s25
      %s29 = sphi 0, %s28
      %s45 = sphi 0, %s29
      %s49 = sphi 0, %s49
      %s51 = sphi 0, %s49
      %s52 = sphi 0, %s51
      %s66 = sphi 0, %s52
      %s72 = sphi 0, %s74
      %s75 = sphi 0, %s72
      %s76 = sphi 0, %s75
      %s92 = sphi 0, %s76
    $region4: #{tpu_custom_call.1} parent=1 // loop_header_branch
      %18 = sbr.rel (%p16) target = $region8
    $region5: #{tpu_custom_call.1} parent=1 // loop_body
      %s20 = ssub.s32 %s15, 1
      %s21 = ssub.s32 %s15, 2
      %s22 = sadd.s32 %s15, 1
      %s23 = ssub.s32 %s15, %s22
      %p24 = scmp.eq.s32.totalorder %s23, 0
      %s26 = sadd.s32 %s25, 1
      %s27 = scalar_select %p24, %s25, %s26
      %p30 = pneg %p24
      %p31 = scmp.eq.s32.totalorder %s15, 3
      %p32 = por %p30, %p31
      %p33 = scmp.ne.s32.totalorder %s25, %s28
      %p34 = scmp.eq.s32.totalorder %s15, 0
      %p35 = por %p33, %p34
      %p36 = scmp.ne.s32.totalorder %s25, %s28
      %p37 = scmp.eq.s32.totalorder %s20, 3
      %p38 = por %p36, %p37
      %p39 = scmp.ne.s32.totalorder %s28, %s29
      %p40 = scmp.eq.s32.totalorder %s20, 0
      %p41 = por %p39, %p40
      %p42 = scmp.ne.s32.totalorder %s28, %s29
      %p43 = scmp.eq.s32.totalorder %s21, 3
      %p44 = por %p42, %p43
      %p46 = scmp.ne.s32.totalorder %s29, %s45
      %p47 = scmp.eq.s32.totalorder %s21, 0
      %p48 = por %p46, %p47
      %s50 = sadd.s32 %s49, 1
      %p53 = scmp.eq.s32.totalorder %s15, 3
      %p54 = scmp.ne.s32.totalorder %s49, %s51
      %p55 = scmp.eq.s32.totalorder %s15, 0
      %p56 = por %p54, %p55
      %p57 = scmp.ne.s32.totalorder %s49, %s51
      %p58 = scmp.eq.s32.totalorder %s20, 3
      %p59 = por %p57, %p58
      %p60 = scmp.ne.s32.totalorder %s51, %s52
      %p61 = scmp.eq.s32.totalorder %s20, 0
      %p62 = por %p60, %p61
      %p63 = scmp.ne.s32.totalorder %s51, %s52
      %p64 = scmp.eq.s32.totalorder %s21, 3
      %p65 = por %p63, %p64
      %p67 = scmp.ne.s32.totalorder %s52, %s66
      %p68 = scmp.eq.s32.totalorder %s21, 0
      %p69 = por %p67, %p68
      %s70 = ssub.s32 %s15, %s22
      %p71 = scmp.eq.s32.totalorder %s70, 0
      %s73 = sadd.s32 %s72, 1
      %s74 = scalar_select %p71, %s72, %s73
      %p77 = pneg %p71
      %p78 = scmp.eq.s32.totalorder %s15, 3
      %p79 = por %p77, %p78
      %p80 = scmp.ne.s32.totalorder %s72, %s75
      %p81 = scmp.eq.s32.totalorder %s15, 0
      %p82 = por %p80, %p81
      %p83 = scmp.ne.s32.totalorder %s72, %s75
      %p84 = scmp.eq.s32.totalorder %s20, 3
      %p85 = por %p83, %p84
      %p86 = scmp.ne.s32.totalorder %s75, %s76
      %p87 = scmp.eq.s32.totalorder %s20, 0
      %p88 = por %p86, %p87
      %p89 = scmp.ne.s32.totalorder %s75, %s76
      %p90 = scmp.eq.s32.totalorder %s21, 3
      %p91 = por %p89, %p90
      %p93 = scmp.ne.s32.totalorder %s76, %s92
      %p94 = scmp.eq.s32.totalorder %s21, 0
      %p95 = por %p93, %p94
      %p96 = scmp.le.s32.totalorder 1, %s15
      %p97 = scmp.lt.s32.totalorder %s15, 5
      %p98 = pnand %p96, %p97
      %p99 = pneg %p98
      // Predicated region
      $region9: #{tpu_custom_call.1} parent=5 // pred_check
        _
      $region10: #{tpu_custom_call.1} parent=5 // pred_check_branch
        %101 = sbr.rel (%p98) target = $region12
      $region11: #{tpu_custom_call.1} parent=5 // pred_region
        %s102 = ssub.s32 %s15, 1
        // Predicated region
        $region13: #{tpu_custom_call.1} parent=11 // pred_check
          %p103 = pneg %p62
        $region14: #{tpu_custom_call.1} parent=11 // pred_check_branch
          %105 = sbr.rel (%p103) target = $region16
        $region15: #{tpu_custom_call.1} parent=11 // pred_region
          %107 = vsyncadd [#allocation7], 0
          %s108 = sshll.u32 %s1, 4
          %s109 = int_to_ptr.hbm [resolvable:$true] %s108
          %s110 = sshll.u32 [#allocation6], 4
          %s111 = int_to_ptr.vmem [resolvable:$true] %s110
          %116 = dma.hbm_to_vmem [thread:$0]  %s109, 256, %s111, [#allocation7], 128, 128, 8
        $region16: #{tpu_custom_call.1} parent=11 // pred_fallthru
          _
      $region12: #{tpu_custom_call.1} parent=5 // pred_fallthru
        _
      %p117 = scmp.lt.s32.totalorder %s15, 4
      // Predicated region
      $region17: #{tpu_custom_call.1} parent=5 // pred_check
        %p118 = pneg %p117
      $region18: #{tpu_custom_call.1} parent=5 // pred_check_branch
        %120 = sbr.rel (%p118) target = $region20
      $region19: #{tpu_custom_call.1} parent=5 // pred_region
        // Predicated region
        $region21: #{tpu_custom_call.1} parent=19 // pred_check
          %p121 = pneg %p35
        $region22: #{tpu_custom_call.1} parent=19 // pred_check_branch
          %123 = sbr.rel (%p121) target = $region24
        $region23: #{tpu_custom_call.1} parent=19 // pred_region
          %s124 = sand.u32 %s25, 1
          %s125 = scalar_lea.sflag [#allocation4], %s124
          %s126 = sand.u32 %s25, 1
          %s127 = smul.addr %s126, 32
          %s128 = scalar_lea.vmem [#allocation3], %s127
          %s129 = smul.u32 2, %s15
          %131 = vsyncadd %s125, 0
          %s132 = smul.addr %s129, 2
          %s133 = smul.addr %s132, 8
          %s134 = scalar_lea.hbm %s0, %s133
          %s135 = sshll.u32 %s134, 4
          %s136 = int_to_ptr.hbm [resolvable:$true] %s135
          %s137 = sshll.u32 %s128, 4
          %s138 = int_to_ptr.vmem [resolvable:$true] %s137
          %143 = dma.hbm_to_vmem [thread:$0]  %s136, 512, %s138, %s125, 128, 128, 8
        $region24: #{tpu_custom_call.1} parent=19 // pred_fallthru
          _
      $region20: #{tpu_custom_call.1} parent=5 // pred_fallthru
        _
      %p144 = scmp.le.s32.totalorder 1, %s15
      %p145 = scmp.lt.s32.totalorder %s15, 5
      %p146 = pnand %p144, %p145
      %p147 = pneg %p146
      // Predicated region
      $region25: #{tpu_custom_call.1} parent=5 // pred_check
        _
      $region26: #{tpu_custom_call.1} parent=5 // pred_check_branch
        %149 = sbr.rel (%p146) target = $region28
      $region27: #{tpu_custom_call.1} parent=5 // pred_region
        %s150 = ssub.s32 %s15, 1
        %s151 = sand.u32 %s28, 1
        %s152 = scalar_lea.sflag [#allocation4], %s151
        %s153 = sand.u32 %s28, 1
        %s154 = smul.addr %s153, 32
        %s155 = scalar_lea.vmem [#allocation3], %s154
        // Predicated region
        $region29: #{tpu_custom_call.1} parent=27 // pred_check
          %p156 = pneg %p41
        $region30: #{tpu_custom_call.1} parent=27 // pred_check_branch
          %158 = sbr.rel (%p156) target = $region32
        $region31: #{tpu_custom_call.1} parent=27 // pred_region
          %160 = dma.done %s152, 512
        $region32: #{tpu_custom_call.1} parent=27 // pred_fallthru
          _
        // Predicated region
        $region33: #{tpu_custom_call.1} parent=27 // pred_check
          %p161 = pneg %p62
        $region34: #{tpu_custom_call.1} parent=27 // pred_check_branch
          %163 = sbr.rel (%p161) target = $region36
        $region35: #{tpu_custom_call.1} parent=27 // pred_region
          %165 = dma.done [#allocation7], 256
        $region36: #{tpu_custom_call.1} parent=27 // pred_fallthru
          _
        %s166 = sand.u32 %s28, 1
        %s167 = scalar_lea.sflag [#allocation4], %s166
        %s168 = sand.u32 %s28, 1
        %s169 = smul.addr %s168, 32
        %s170 = scalar_lea.vmem [#allocation3], %s169
        %p171 = pneg %p41
        %p172 = pneg %p38
        %p173 = pneg %p62
        %p174 = pneg %p59
        %p175 = pneg %p88
        %p176 = pneg %p85
        %s177 = sand.u32 %s75, 1
        %s178 = scalar_lea.sflag [#allocation5], %s177
        %s179 = sand.u32 %s75, 1
        %s180 = smul.addr %s179, 32
        %s181 = scalar_lea.vmem [#allocation8], %s180
        %s182 = smul.u32 2, %s20
        %s183 = smul.u32 2, %s20
        %v184 = vld [vmem:[%s155] sm:$0xff]
        %v185 = vld [vmem:[%s155 + $0x8] sm:$0xff]
        %v186 = vld [vmem:[%s155 + $0x10] sm:$0xff]
        %v187 = vld [vmem:[%s155 + $0x18] sm:$0xff]
        %vm188 = vcmask 130048
        %189 = vst.msk [vmem:[#allocation2] sm:$0xff] %vm188, 0.0
        %190 = vst.msk [vmem:[#allocation2 + $0x8] sm:$0xff] %vm188, 0.0
        %191 = vst.msk [vmem:[#allocation2 + $0x10] sm:$0xff] %vm188, 0.0
        %192 = vst.msk [vmem:[#allocation2 + $0x18] sm:$0xff] %vm188, 0.0
        %v193 = vld [vmem:[#allocation6] sm:$0xff]
        %v194 = vld [vmem:[#allocation6 + $0x8] sm:$0xff]
        %v196 = vsel %vm188, %v184, 0
        %v199 = vsel %vm188, %v185, 0
        %v202 = vsel %vm188, %v186, 0
        %v205 = vsel %vm188, %v187, 0
        %207 = vmatpush.msra.mxu0 0.0
        %208 = vmatpush.msra.mxu0 0.0
        %209 = vmatpush.msra.mxu0 0.0
        %210 = vmatpush.msra.mxu0 0.0
        %211 = vmatpush.msra.mxu0 0.0
        %212 = vmatpush.msra.mxu0 0.0
        %213 = vmatpush.msra.mxu0 0.0
        %214 = vmatpush.msra.mxu0 0.0
        %215 = vmatpush.msra.mxu0 0.0
        %216 = vmatpush.msra.mxu0 0.0
        %217 = vmatpush.msra.mxu0 0.0
        %218 = vmatpush.msra.mxu0 0.0
        %219 = vmatpush.msra.mxu0 0.0
        %220 = vmatpush.msra.mxu0 0.0
        %221 = vmatpush.msra.mxu0 %v194
        %222 = vmatpush.msra.mxu0 %v193
        %223 = vmatmul.f32.gmra.mxu0 %v196
        %v224 = vpop.f32.mrf.mxu0
        %v225 = vadd.f32 0.0, %v224
        %226 = vmatmul.f32.gmra.mxu0 %v199
        %v227 = vpop.f32.mrf.mxu0
        %v228 = vadd.f32 0.0, %v227
        %229 = vmatmul.f32.gmra.mxu0 %v202
        %v230 = vpop.f32.mrf.mxu0
        %v231 = vadd.f32 0.0, %v230
        %232 = vmatmul.f32.gmra.mxu0 %v205
        %v233 = vpop.f32.mrf.mxu0
        %v234 = vadd.f32 0.0, %v233
        %235 = vdwg.mxu0
        %v236 = vld [vmem:[#allocation2 + $0x2] sm:$0xff]
        %v237 = vld [vmem:[#allocation2 + $0xa] sm:$0x3f]
        %v238 = vld [vmem:[#allocation2 + $0x12] sm:$0xff]
        %v239 = vld [vmem:[#allocation2 + $0x1a] sm:$0x3f]
        %v240 = vmul.f32 %v225, 0.125
        %v241 = vmul.f32 %v228, 0.125
        %v242 = vmul.f32 %v231, 0.125
        %v243 = vmul.f32 %v234, 0.125
        %v244 = vadd.f32 %v236, %v240
        %v245 = vadd.f32 %v237, %v241
        %v246 = vadd.f32 %v238, %v242
        %v247 = vadd.f32 %v239, %v243
        %248 = vst.msk [vmem:[#allocation2 + $0x2] sm:$0xff] %vm188, %v244
        %vm249 = vcmask 128000
        %250 = vst.msk [vmem:[#allocation2 + $0xa] sm:$0x3f] %vm249, %v245
        %251 = vst.msk [vmem:[#allocation2 + $0x12] sm:$0xff] %vm188, %v246
        %252 = vst.msk [vmem:[#allocation2 + $0x1a] sm:$0x3f] %vm249, %v247
        %v253 = vld [vmem:[#allocation2 + $0x1] sm:$0xff]
        %v254 = vld [vmem:[#allocation2 + $0x9] sm:$0x7f]
        %v255 = vld [vmem:[#allocation2 + $0x11] sm:$0xff]
        %v256 = vld [vmem:[#allocation2 + $0x19] sm:$0x7f]
        %v257 = vmul.f32 %v225, 0.375
        %v258 = vmul.f32 %v228, 0.375
        %v259 = vmul.f32 %v231, 0.375
        %v260 = vmul.f32 %v234, 0.375
        %v261 = vadd.f32 %v253, %v257
        %v262 = vadd.f32 %v254, %v258
        %v263 = vadd.f32 %v255, %v259
        %v264 = vadd.f32 %v256, %v260
        %265 = vst.msk [vmem:[#allocation2 + $0x1] sm:$0xff] %vm188, %v261
        %vm266 = vcmask 129024
        %267 = vst.msk [vmem:[#allocation2 + $0x9] sm:$0x7f] %vm266, %v262
        %268 = vst.msk [vmem:[#allocation2 + $0x11] sm:$0xff] %vm188, %v263
        %269 = vst.msk [vmem:[#allocation2 + $0x19] sm:$0x7f] %vm266, %v264
        %v270 = vld [vmem:[#allocation2] sm:$0xff]
        %v271 = vld [vmem:[#allocation2 + $0x8] sm:$0xff]
        %v272 = vld [vmem:[#allocation2 + $0x10] sm:$0xff]
        %v273 = vld [vmem:[#allocation2 + $0x18] sm:$0xff]
        %v274 = vadd.f32 %v270, %v257
        %v275 = vadd.f32 %v271, %v258
        %v276 = vadd.f32 %v272, %v259
        %v277 = vadd.f32 %v273, %v260
        %278 = vst.msk [vmem:[#allocation2] sm:$0xff] %vm188, %v274
        %279 = vst.msk [vmem:[#allocation2 + $0x8] sm:$0xff] %vm188, %v275
        %280 = vst.msk [vmem:[#allocation2 + $0x10] sm:$0xff] %vm188, %v276
        %281 = vst.msk [vmem:[#allocation2 + $0x18] sm:$0xff] %vm188, %v277
        %v282 = vld [vmem:[#allocation2] sm:$0xff]
        %v283 = vld [vmem:[#allocation2 + $0x8] sm:$0x7f]
        %v284 = vld [vmem:[#allocation2 + $0x10] sm:$0xff]
        %v285 = vld [vmem:[#allocation2 + $0x18] sm:$0x7f]
        %vm290 = vcmask 1046528
        %v291 = vrot.slane %v240, 1
        %v292 = vrot.slane %v241, 1
        %v293 = vsel %vm290, %v291, %v292
        %v294 = vrot.slane %v242, 1
        %v295 = vrot.slane %v243, 1
        %v296 = vsel %vm290, %v294, %v295
        %v301 = vadd.f32 %v282, %v293
        %v302 = vadd.f32 %v283, %v292
        %v303 = vadd.f32 %v284, %v296
        %v304 = vadd.f32 %v285, %v295
        %305 = vst.msk [vmem:[#allocation2] sm:$0xff] %vm188, %v301
        %306 = vst.msk [vmem:[#allocation2 + $0x8] sm:$0x7f] %vm266, %v302
        %307 = vst.msk [vmem:[#allocation2 + $0x10] sm:$0xff] %vm188, %v303
        %308 = vst.msk [vmem:[#allocation2 + $0x18] sm:$0x7f] %vm266, %v304
        %v309 = vld [vmem:[#allocation2] sm:$0xff]
        %v310 = vld [vmem:[#allocation2 + $0x8] sm:$0xff]
        %v311 = vld [vmem:[#allocation2 + $0x10] sm:$0xff]
        %v312 = vld [vmem:[#allocation2 + $0x18] sm:$0xff]
        %313 = vst.msk [vmem:[%s181] sm:$0xff] %vm188, %v309
        %314 = vst.msk [vmem:[%s181 + $0x8] sm:$0xff] %vm188, %v310
        %315 = vst.msk [vmem:[%s181 + $0x10] sm:$0xff] %vm188, %v311
        %316 = vst.msk [vmem:[%s181 + $0x18] sm:$0xff] %vm188, %v312
        %s317 = sand.u32 %s75, 1
        %s318 = scalar_lea.sflag [#allocation5], %s317
        %s319 = sand.u32 %s75, 1
        %s320 = smul.addr %s319, 32
        %s321 = scalar_lea.vmem [#allocation8], %s320
        // Predicated region
        $region37: #{tpu_custom_call.1} parent=27 // pred_check
          %p322 = pneg %p85
        $region38: #{tpu_custom_call.1} parent=27 // pred_check_branch
          %324 = sbr.rel (%p322) target = $region40
        $region39: #{tpu_custom_call.1} parent=27 // pred_region
          %s325 = smul.u32 2, %s20
          %327 = vsyncadd %s318, 0
          %s328 = smul.addr %s325, 2
          %s329 = smul.addr %s328, 8
          %s330 = scalar_lea.hbm %s2, %s329
          %s331 = sshll.u32 %s321, 4
          %s332 = int_to_ptr.vmem [resolvable:$true] %s331
          %s333 = sshll.u32 %s330, 4
          %s334 = int_to_ptr.hbm [resolvable:$true] %s333
          %339 = dma.vmem_to_hbm [thread:$0]  %s332, 512, %s334, %s318, 128, 128, 8
        $region40: #{tpu_custom_call.1} parent=27 // pred_fallthru
          _
      $region28: #{tpu_custom_call.1} parent=5 // pred_fallthru
        _
      %p340 = scmp.le.s32.totalorder 2, %s15
      // Predicated region
      $region41: #{tpu_custom_call.1} parent=5 // pred_check
        %p341 = pneg %p340
      $region42: #{tpu_custom_call.1} parent=5 // pred_check_branch
        %343 = sbr.rel (%p341) target = $region44
      $region43: #{tpu_custom_call.1} parent=5 // pred_region
        %s344 = ssub.s32 %s15, 2
        // Predicated region
        $region45: #{tpu_custom_call.1} parent=43 // pred_check
          %p345 = pneg %p91
        $region46: #{tpu_custom_call.1} parent=43 // pred_check_branch
          %347 = sbr.rel (%p345) target = $region48
        $region47: #{tpu_custom_call.1} parent=43 // pred_region
          %s348 = sand.u32 %s76, 1
          %s349 = scalar_lea.sflag [#allocation5], %s348
          %s350 = sand.u32 %s76, 1
          %s351 = smul.addr %s350, 32
          %s352 = scalar_lea.vmem [#allocation8], %s351
          %354 = dma.done %s349, 512
        $region48: #{tpu_custom_call.1} parent=43 // pred_fallthru
          _
      $region44: #{tpu_custom_call.1} parent=5 // pred_fallthru
        _
    $region6: #{tpu_custom_call.1} parent=1 // loop_footer
      %s19 = sadd.s32 1, %s15
    $region7: #{tpu_custom_call.1} parent=1 // loop_footer_branch
      %14 = sbr.rel target = $region3
    $region8: #{tpu_custom_call.1} parent=1 // loop_exit
      _
    %355 = vsyncpa [#allocation4], 1
    %s356 = scalar_lea.sflag [#allocation4], 1
    %357 = vsyncpa %s356, 1
    %358 = vsyncpa [#allocation7], 1
    %359 = vsyncpa [#allocation5], 1
    %s360 = scalar_lea.sflag [#allocation5], 1
    %361 = vsyncpa %s360, 1

</llo_original>
